<compile_context>
chip_gen: v7x
topology: tpu7x:2x2x1
jax: 0.10.0
libtpu: 0.0.40
codegen_flags: <defaults>
</compile_context>

<pallas_src>
import functools

import jax
import jax.numpy as jnp
from jax.experimental import pallas as pl
from jax.experimental.pallas import tpu as pltpu

LANES = 128                 # vreg lane width
SUBLANES = 8                # vreg sublane count (f32)
ROW_ALIGN = 16              # row alignment (covers bf16 (16,128) tiling too)
DEFAULT_BLOCK_ROWS = 4096   # (4096,128): 2 MiB f32 / 1 MiB bf16 per tile


def _num_tensorcores():
    """Best-effort TensorCore count (2 on v7x, 1 on v5e/v6e); safe fallback 2."""
    try:
        info = pltpu.get_tpu_info()
        for attr in ("num_cores", "core_count", "num_tensorcores",
                     "tensorcore_count"):
            v = getattr(info, attr, None)
            if isinstance(v, int) and 1 <= v <= 8:
                return v
    except Exception:
        pass
    try:
        v = getattr(jax.devices()[0], "num_cores", None)
        if isinstance(v, int) and 1 <= v <= 8:
            return v
    except Exception:
        pass
    # Falling back to 2 is always correct (redundant blocks are skipped).
    return 2


def _l1_kernel(p_ref, t_ref, o_ref, *, rows, block_rows, steps_per_core,
               num_blocks, mask_last):
    """Accumulate sum(|p - t|) into a per-core resident (8,128) accumulator."""
    c = pl.program_id(0)    # "parallel" axis: TensorCore split
    s = pl.program_id(1)    # "arbitrary" axis: sequential reduction

    @pl.when(s == 0)
    def _():
        o_ref[...] = jnp.zeros_like(o_ref)

    blk = c * steps_per_core + s            # nominal (unclamped) block id

    def accum(mask_rows):
        d = jnp.abs(p_ref[...].astype(jnp.float32)
                    - t_ref[...].astype(jnp.float32))
        if mask_rows:
            # Only whole garbage rows (past the true row count) need masking;
            # the zero-padded tail between n and rows*128 already contributes 0.
            row_ids = (blk * block_rows
                       + jax.lax.broadcasted_iota(jnp.int32,
                                                  (block_rows, LANES), 0))
            d = jnp.where(row_ids < rows, d, 0.0)
        # Sublane-preserving fold (block_rows,128) -> (8,128): pure VPU adds.
        o_ref[...] += jnp.sum(
            d.reshape(block_rows // SUBLANES, SUBLANES, LANES), axis=0)

    if mask_last:
        @pl.when(blk < num_blocks - 1)      # interior blocks: no masking
        def _():
            accum(False)

        @pl.when(blk == num_blocks - 1)     # partial last block: row mask
        def _():
            accum(True)
    else:
        @pl.when(blk < num_blocks)          # all real blocks: no masking
        def _():
            accum(False)
    # blk >= num_blocks: redundant clamped block from the core split -> skip.


def l1_loss(pred, target, loss_weight=1.0, block_rows=DEFAULT_BLOCK_ROWS):
    """Pallas equivalent of loss_weight * nn.L1Loss()(pred, target)."""
    assert pred.shape == target.shape, "pred/target shapes must match"
    n = pred.size
    num_cores = _num_tensorcores()

    # Keep native dtype (bf16 streams as bf16; upcast happens in-kernel).
    p_flat = pred.reshape(-1)
    t_flat = target.reshape(-1)

    # Zero-pad to (16*128)-element alignment so rows is a multiple of 16 and
    # interior blocks need no masking (at most 2047 extra zeros).
    pad = (-n) % (ROW_ALIGN * LANES)
    if pad:
        p_flat = jnp.pad(p_flat, (0, pad))
        t_flat = jnp.pad(t_flat, (0, pad))

    rows = p_flat.size // LANES              # multiple of 16
    p2d = p_flat.reshape(rows, LANES)
    t2d = t_flat.reshape(rows, LANES)

    block_rows = max(ROW_ALIGN, (int(block_rows) // ROW_ALIGN) * ROW_ALIGN)
    br = min(block_rows, rows)               # multiple of 16, or full extent
    num_blocks = pl.cdiv(rows, br)
    steps_per_core = pl.cdiv(num_blocks, num_cores)
    mask_last = (rows % br) != 0             # only then is the last block partial

    def in_map(c, s):
        # Clamp so redundant steps from the core split never address a fully
        # out-of-bounds block; their compute is skipped inside the kernel.
        return (jnp.minimum(c * steps_per_core + s, num_blocks - 1), 0)

    kernel = functools.partial(
        _l1_kernel, rows=rows, block_rows=br, steps_per_core=steps_per_core,
        num_blocks=num_blocks, mask_last=mask_last)

    partials = pl.pallas_call(
        kernel,
        out_shape=jax.ShapeDtypeStruct((num_cores * SUBLANES, LANES),
                                       jnp.float32),
        grid_spec=pltpu.PrefetchScalarGridSpec(
            num_scalar_prefetch=0,
            grid=(num_cores, steps_per_core),
            in_specs=[
                pl.BlockSpec((br, LANES), in_map),
                pl.BlockSpec((br, LANES), in_map),
            ],
            out_specs=pl.BlockSpec((SUBLANES, LANES), lambda c, s: (c, 0)),
        ),
        compiler_params=pltpu.CompilerParams(
            dimension_semantics=("parallel", "arbitrary"),
        ),
    )(p2d, t2d)

    # Single final cross-lane/sublane reduce + mean scaling (outside the kernel).
    return jnp.float32(loss_weight) * (jnp.sum(partials) / jnp.float32(n))


def loss_func(pred, target):
    """Forward of LossFunc: L1 term via the Pallas kernel."""
    l_l1 = l1_loss(pred, target, loss_weight=1.0)
    # TODO(synk): ContextualLoss term (0.01 * contextual loss over pretrained
    # VGG19 conv features) requires pretrained weights + the contextual-loss
    # library; no self-contained Pallas equivalent, so only the L1 term is
    # computed here.
    return l_l1


if __name__ == "__main__":
    key = jax.random.PRNGKey(0)
    k1, k2, k3, k4, k5, k6 = jax.random.split(key, 6)

    # Small NCHW shapes consistent with the module's image-loss usage.
    pred = jax.random.normal(k1, (2, 4, 16, 16), dtype=jnp.float32)
    target = jax.random.normal(k2, (2, 4, 16, 16), dtype=jnp.float32)
    loss = jax.block_until_ready(loss_func(pred, target))
    ref = jnp.mean(jnp.abs(pred - target))
    assert jnp.allclose(loss, ref, rtol=1e-5, atol=1e-6), (loss, ref)

    # Ragged shape: exercises the zero-pad path.
    pred2 = jax.random.normal(k3, (3, 5, 7, 11), dtype=jnp.float32)
    target2 = jax.random.normal(k4, (3, 5, 7, 11), dtype=jnp.float32)
    loss2 = jax.block_until_ready(l1_loss(pred2, target2, loss_weight=0.5))
    ref2 = 0.5 * jnp.mean(jnp.abs(pred2 - target2))
    assert jnp.allclose(loss2, ref2, rtol=1e-5, atol=1e-6), (loss2, ref2)

    # Partial-last-block path (rows=48 not a multiple of br=32) + bf16 streaming.
    pred3 = jax.random.normal(k5, (48, 128), dtype=jnp.bfloat16)
    target3 = jax.random.normal(k6, (48, 128), dtype=jnp.bfloat16)
    loss3 = jax.block_until_ready(l1_loss(pred3, target3, block_rows=32))
    ref3 = jnp.mean(jnp.abs(pred3.astype(jnp.float32)
                            - target3.astype(jnp.float32)))
    assert jnp.allclose(loss3, ref3, rtol=1e-3, atol=1e-5), (loss3, ref3)

    print("KERNEL_OK")
</pallas_src>

<mosaic_0001>
module attributes {stable_mosaic.version = 11 : i64} {
  func.func @_l1_kernel(%arg0: i32, %arg1: i32, %arg2: memref<16x128xf32, #tpu.memory_space<vmem>>, %arg3: memref<16x128xf32, #tpu.memory_space<vmem>>, %arg4: memref<8x128xf32, #tpu.memory_space<vmem>>) attributes {dimension_semantics = [#tpu.dimension_semantics<parallel>, #tpu.dimension_semantics<arbitrary>], iteration_bounds = array<i64: 2, 1>, scalar_prefetch = 0 : i64, scratch_operands = 0 : i64, tpu.core_type = #tpu.core_type<tc>, window_params = [{transform_indices = @transform_0, window_bounds = array<i64: 16, 128>}, {transform_indices = @transform_1, window_bounds = array<i64: 16, 128>}, {transform_indices = @transform_2, window_bounds = array<i64: 8, 128>}]} {
    %c0_i32 = arith.constant 0 : i32
    %0 = arith.cmpi eq, %arg1, %c0_i32 : i32
    %1 = arith.extui %0 : i1 to i32
    %c0_i32_0 = arith.constant 0 : i32
    %2 = arith.cmpi ne, %1, %c0_i32_0 : i32
    scf.if %2 {
      %cst = arith.constant 0.000000e+00 : f32
      %8 = vector.broadcast %cst : f32 to vector<8x128xf32>
      %c0 = arith.constant 0 : index
      %c0_3 = arith.constant 0 : index
      %9 = vector.load %arg4[%c0, %c0_3] : memref<8x128xf32, #tpu.memory_space<vmem>>, vector<8x128xf32>
      tpu.vector_store %arg4[%c0, %c0_3], %8 {strides = array<i32>} : memref<8x128xf32, #tpu.memory_space<vmem>>, vector<8x128xf32>,
    } else {
    }
    %c1_i32 = arith.constant 1 : i32
    %3 = arith.muli %arg0, %c1_i32 : i32
    %4 = arith.addi %3, %arg1 : i32
    %c1_i32_1 = arith.constant 1 : i32
    %5 = arith.cmpi slt, %4, %c1_i32_1 : i32
    %6 = arith.extui %5 : i1 to i32
    %c0_i32_2 = arith.constant 0 : i32
    %7 = arith.cmpi ne, %6, %c0_i32_2 : i32
    scf.if %7 {
      %c0 = arith.constant 0 : index
      %c0_3 = arith.constant 0 : index
      %8 = vector.load %arg2[%c0, %c0_3] : memref<16x128xf32, #tpu.memory_space<vmem>>, vector<16x128xf32>
      %c0_4 = arith.constant 0 : index
      %c0_5 = arith.constant 0 : index
      %9 = vector.load %arg3[%c0_4, %c0_5] : memref<16x128xf32, #tpu.memory_space<vmem>>, vector<16x128xf32>
      %10 = arith.subf %8, %9 : vector<16x128xf32>
      %11 = math.absf %10 : vector<16x128xf32>
      %c0_6 = arith.constant 0 : index
      %c0_7 = arith.constant 0 : index
      %12 = vector.load %arg4[%c0_6, %c0_7] : memref<8x128xf32, #tpu.memory_space<vmem>>, vector<8x128xf32>
      %13 = vector.shape_cast %11 : vector<16x128xf32> to vector<2x8x128xf32>
      %cst = arith.constant dense<0.000000e+00> : vector<8x128xf32>
      %14 = vector.multi_reduction <add>, %13, %cst [0] : vector<2x8x128xf32> to vector<8x128xf32>
      %15 = arith.addf %12, %14 : vector<8x128xf32>
      %c0_8 = arith.constant 0 : index
      %c0_9 = arith.constant 0 : index
      %16 = vector.load %arg4[%c0_8, %c0_9] : memref<8x128xf32, #tpu.memory_space<vmem>>, vector<8x128xf32>
      tpu.vector_store %arg4[%c0_8, %c0_9], %15 {strides = array<i32>} : memref<8x128xf32, #tpu.memory_space<vmem>>, vector<8x128xf32>,
    } else {
    }
    return
  }
  func.func @transform_0(%arg0: i32, %arg1: i32) -> (i32, i32) {
    %c1_i32 = arith.constant 1 : i32
    %0 = arith.muli %arg0, %c1_i32 : i32
    %1 = arith.addi %0, %arg1 : i32
    %c0_i32 = arith.constant 0 : i32
    %2 = arith.minsi %1, %c0_i32 : i32
    %c0_i32_0 = arith.constant 0 : i32
    %c0_i32_1 = arith.constant 0 : i32
    return %2, %c0_i32_0 : i32, i32
  }
  func.func @transform_1(%arg0: i32, %arg1: i32) -> (i32, i32) {
    %c1_i32 = arith.constant 1 : i32
    %0 = arith.muli %arg0, %c1_i32 : i32
    %1 = arith.addi %0, %arg1 : i32
    %c0_i32 = arith.constant 0 : i32
    %2 = arith.minsi %1, %c0_i32 : i32
    %c0_i32_0 = arith.constant 0 : i32
    %c0_i32_1 = arith.constant 0 : i32
    return %2, %c0_i32_0 : i32, i32
  }
  func.func @transform_2(%arg0: i32, %arg1: i32) -> (i32, i32) {
    %c0_i32 = arith.constant 0 : i32
    %c0_i32_0 = arith.constant 0 : i32
    return %arg0, %c0_i32 : i32, i32
  }
}

</mosaic_0001>

<llo_original>
// kernel: tpu_custom_call.1
$region0: #{tpu_custom_call.1}
  #allocation0 [shape = 'u32[]', space=smem, size = 0x4, offset = 0x4, fixed_abs, tag = 'smem constant byte address 0x4 - core index']
  #allocation1 [shape = 'u32[144,128]{1,0:T(1,128)}', space=vmem, size = 0x12000, scoped, tag = 'internal scratch']
  %s0 = inlined_call_operand.hbm [shape: f32[16,128], index: 0, kind: input, shape index: {}]
  %s1 = inlined_call_operand.hbm [shape: f32[16,128], index: 1, kind: input, shape index: {}]
  %s2 = inlined_call_operand.hbm [shape: f32[16,128], index: 2, kind: output, shape index: {}]
  %s3 = sld [smem:[#allocation0]]
  $region57: #{tpu_custom_call.1} parent=0
    _
  %s5 = ssub.s32 1, %s3
  %s6 = scalar_select 0, %s5, %s3
  $region1: #{tpu_custom_call.1} parent=0
    #allocation2 [shape = 'u8[16384]{0}', space=vmem, size = 0x4000, scoped, tag = 'input window, operand 0']
    #allocation3 [shape = 's32[2]{0}', space=sflag, size = 0x8, scoped, tag = 'scoped memory for tpu_custom_call.1']
    #allocation4 [shape = 's32[2]{0}', space=sflag, size = 0x8, scoped, tag = 'scoped memory for tpu_custom_call.1']
    #allocation5 [shape = 'u8[16384]{0}', space=vmem, size = 0x4000, scoped, tag = 'input window, operand 1']
    #allocation6 [shape = 's32[2]{0}', space=sflag, size = 0x8, scoped, tag = 'scoped memory for tpu_custom_call.1']
    #allocation7 [shape = 'u8[8192]{0}', space=vmem, size = 0x2000, scoped, tag = 'output window, operand 0']
    %7 = vsyncpa [#allocation3], 0
    %s8 = scalar_lea.sflag [#allocation3], 1
    %9 = vsyncpa %s8, 0
    %10 = vsyncpa [#allocation6], 0
    %s11 = scalar_lea.sflag [#allocation6], 1
    %12 = vsyncpa %s11, 0
    %13 = vsyncpa [#allocation4], 0
    %s14 = scalar_lea.sflag [#allocation4], 1
    %15 = vsyncpa %s14, 0
    loop: start=0, step=1, limit=4
    $region2: #{tpu_custom_call.1} parent=1 // loop_pre_header
      _
    $region3: #{tpu_custom_call.1} parent=1 // loop_header
      %s17 = sphi 0, %s21
      %p18 = scmp.ge.s32.totalorder %s17, 4
      %s24 = sphi 0, %s36
      %s25 = sphi 0, %s32
      %s26 = sphi 0, %s24
      %s27 = sphi 0, %s25
      %s28 = sphi 0, %s26
      %s29 = sphi 0, %s27
      %s45 = sphi 0, %s47
      %s48 = sphi 0, %s45
      %s49 = sphi 0, %s48
      %s65 = sphi 0, %s49
      %s77 = sphi 0, %s79
      %s80 = sphi 0, %s77
      %s81 = sphi 0, %s80
      %s97 = sphi 0, %s81
      %s103 = sphi 0, %s105
      %s106 = sphi 0, %s103
      %s107 = sphi 0, %s106
      %s123 = sphi 0, %s107
    $region4: #{tpu_custom_call.1} parent=1 // loop_header_branch
      %20 = sbr.rel (%p18) target = $region8
    $region5: #{tpu_custom_call.1} parent=1 // loop_body
      %s22 = ssub.s32 %s17, 1
      %s23 = ssub.s32 %s17, 2
      %s30 = sadd.s32 1, %s25
      %p31 = scmp.ge.s32.totalorder %s30, 1
      %s32 = scalar_select %p31, 0, %s30
      %s33 = sadd.s32 1, %s24
      %s34 = scalar_select %p31, %s33, %s24
      %p35 = scmp.ge.s32.totalorder %s34, 2
      %s36 = scalar_select %p35, 0, %s34
      %s37 = sadd.s32 %s24, %s25
      %p38 = scmp.lt.s32.totalorder %s37, 0
      %s39 = scalar_select %p38, %s37, 0
      %s40 = sadd.s32 %s36, %s32
      %p41 = scmp.lt.s32.totalorder %s40, 0
      %s42 = scalar_select %p41, %s40, 0
      %s43 = ssub.s32 %s39, %s42
      %p44 = scmp.eq.s32.totalorder %s43, 0
      %s46 = sadd.s32 %s45, 1
      %s47 = scalar_select %p44, %s45, %s46
      %p50 = pneg %p44
      %p51 = scmp.eq.s32.totalorder %s17, 1
      %p52 = por %p50, %p51
      %p53 = scmp.ne.s32.totalorder %s45, %s48
      %p54 = scmp.eq.s32.totalorder %s17, 0
      %p55 = por %p53, %p54
      %p56 = scmp.ne.s32.totalorder %s45, %s48
      %p57 = scmp.eq.s32.totalorder %s22, 1
      %p58 = por %p56, %p57
      %p59 = scmp.ne.s32.totalorder %s48, %s49
      %p60 = scmp.eq.s32.totalorder %s22, 0
      %p61 = por %p59, %p60
      %p62 = scmp.ne.s32.totalorder %s48, %s49
      %p63 = scmp.eq.s32.totalorder %s23, 1
      %p64 = por %p62, %p63
      %p66 = scmp.ne.s32.totalorder %s49, %s65
      %p67 = scmp.eq.s32.totalorder %s23, 0
      %p68 = por %p66, %p67
      %s69 = sadd.s32 %s24, %s25
      %p70 = scmp.lt.s32.totalorder %s69, 0
      %s71 = scalar_select %p70, %s69, 0
      %s72 = sadd.s32 %s36, %s32
      %p73 = scmp.lt.s32.totalorder %s72, 0
      %s74 = scalar_select %p73, %s72, 0
      %s75 = ssub.s32 %s71, %s74
      %p76 = scmp.eq.s32.totalorder %s75, 0
      %s78 = sadd.s32 %s77, 1
      %s79 = scalar_select %p76, %s77, %s78
      %p82 = pneg %p76
      %p83 = scmp.eq.s32.totalorder %s17, 1
      %p84 = por %p82, %p83
      %p85 = scmp.ne.s32.totalorder %s77, %s80
      %p86 = scmp.eq.s32.totalorder %s17, 0
      %p87 = por %p85, %p86
      %p88 = scmp.ne.s32.totalorder %s77, %s80
      %p89 = scmp.eq.s32.totalorder %s22, 1
      %p90 = por %p88, %p89
      %p91 = scmp.ne.s32.totalorder %s80, %s81
      %p92 = scmp.eq.s32.totalorder %s22, 0
      %p93 = por %p91, %p92
      %p94 = scmp.ne.s32.totalorder %s80, %s81
      %p95 = scmp.eq.s32.totalorder %s23, 1
      %p96 = por %p94, %p95
      %p98 = scmp.ne.s32.totalorder %s81, %s97
      %p99 = scmp.eq.s32.totalorder %s23, 0
      %p100 = por %p98, %p99
      %s101 = ssub.s32 %s24, %s36
      %p102 = scmp.eq.s32.totalorder %s101, 0
      %s104 = sadd.s32 %s103, 1
      %s105 = scalar_select %p102, %s103, %s104
      %p108 = pneg %p102
      %p109 = scmp.eq.s32.totalorder %s17, 1
      %p110 = por %p108, %p109
      %p111 = scmp.ne.s32.totalorder %s103, %s106
      %p112 = scmp.eq.s32.totalorder %s17, 0
      %p113 = por %p111, %p112
      %p114 = scmp.ne.s32.totalorder %s103, %s106
      %p115 = scmp.eq.s32.totalorder %s22, 1
      %p116 = por %p114, %p115
      %p117 = scmp.ne.s32.totalorder %s106, %s107
      %p118 = scmp.eq.s32.totalorder %s22, 0
      %p119 = por %p117, %p118
      %p120 = scmp.ne.s32.totalorder %s106, %s107
      %p121 = scmp.eq.s32.totalorder %s23, 1
      %p122 = por %p120, %p121
      %p124 = scmp.ne.s32.totalorder %s107, %s123
      %p125 = scmp.eq.s32.totalorder %s23, 0
      %p126 = por %p124, %p125
      %p127 = scmp.le.s32.totalorder 1, %s17
      %p128 = scmp.lt.s32.totalorder %s17, 3
      %p129 = pnand %p127, %p128
      %p130 = pneg %p129
      // Predicated region
      $region9: #{tpu_custom_call.1} parent=5 // pred_check
        _
      $region10: #{tpu_custom_call.1} parent=5 // pred_check_branch
        %132 = sbr.rel (%p129) target = $region12
      $region11: #{tpu_custom_call.1} parent=5 // pred_region
        %s133 = ssub.s32 %s17, 1
      $region12: #{tpu_custom_call.1} parent=5 // pred_fallthru
        _
      %p134 = scmp.lt.s32.totalorder %s17, 2
      // Predicated region
      $region13: #{tpu_custom_call.1} parent=5 // pred_check
        %p135 = pneg %p134
      $region14: #{tpu_custom_call.1} parent=5 // pred_check_branch
        %137 = sbr.rel (%p135) target = $region16
      $region15: #{tpu_custom_call.1} parent=5 // pred_region
        // Predicated region
        $region17: #{tpu_custom_call.1} parent=15 // pred_check
          %p138 = pneg %p55
        $region18: #{tpu_custom_call.1} parent=15 // pred_check_branch
          %140 = sbr.rel (%p138) target = $region20
        $region19: #{tpu_custom_call.1} parent=15 // pred_region
          %s141 = sand.u32 %s45, 1
          %s142 = scalar_lea.sflag [#allocation3], %s141
          %s143 = sand.u32 %s45, 1
          %s144 = smul.addr %s143, 16
          %s145 = scalar_lea.vmem [#allocation2], %s144
          %s146 = sadd.s32 %s24, %s25
          %p147 = scmp.lt.s32.totalorder %s146, 0
          %s148 = scalar_select %p147, %s146, 0
          %s149 = smul.u32 2, %s148
          %s151 = ssub.s32 256, 256
          %152 = vsyncadd %s142, %s151
          %s153 = smul.addr %s149, 128
          %s154 = scalar_lea.hbm %s0, %s153
          %s155 = sshll.u32 %s145, 4
          %s156 = int_to_ptr.vmem [resolvable:$true] %s155
          %161 = dma.hbm_to_vmem [thread:$0]  %s154, 256, %s156, %s142, 128, 128, 8
        $region20: #{tpu_custom_call.1} parent=15 // pred_fallthru
          _
        // Predicated region
        $region21: #{tpu_custom_call.1} parent=15 // pred_check
          %p162 = pneg %p87
        $region22: #{tpu_custom_call.1} parent=15 // pred_check_branch
          %164 = sbr.rel (%p162) target = $region24
        $region23: #{tpu_custom_call.1} parent=15 // pred_region
          %s165 = sand.u32 %s77, 1
          %s166 = scalar_lea.sflag [#allocation6], %s165
          %s167 = sand.u32 %s77, 1
          %s168 = smul.addr %s167, 16
          %s169 = scalar_lea.vmem [#allocation5], %s168
          %s170 = sadd.s32 %s24, %s25
          %p171 = scmp.lt.s32.totalorder %s170, 0
          %s172 = scalar_select %p171, %s170, 0
          %s173 = smul.u32 2, %s172
          %s175 = ssub.s32 256, 256
          %176 = vsyncadd %s166, %s175
          %s177 = smul.addr %s173, 128
          %s178 = scalar_lea.hbm %s1, %s177
          %s179 = sshll.u32 %s169, 4
          %s180 = int_to_ptr.vmem [resolvable:$true] %s179
          %185 = dma.hbm_to_vmem [thread:$0]  %s178, 256, %s180, %s166, 128, 128, 8
        $region24: #{tpu_custom_call.1} parent=15 // pred_fallthru
          _
      $region16: #{tpu_custom_call.1} parent=5 // pred_fallthru
        _
      %p186 = scmp.le.s32.totalorder 1, %s17
      %p187 = scmp.lt.s32.totalorder %s17, 3
      %p188 = pnand %p186, %p187
      %p189 = pneg %p188
      // Predicated region
      $region25: #{tpu_custom_call.1} parent=5 // pred_check
        _
      $region26: #{tpu_custom_call.1} parent=5 // pred_check_branch
        %191 = sbr.rel (%p188) target = $region28
      $region27: #{tpu_custom_call.1} parent=5 // pred_region
        %s192 = ssub.s32 %s17, 1
        %s193 = sand.u32 %s48, 1
        %s194 = scalar_lea.sflag [#allocation3], %s193
        %s195 = sand.u32 %s48, 1
        %s196 = smul.addr %s195, 16
        %s197 = scalar_lea.vmem [#allocation2], %s196
        // Predicated region
        $region29: #{tpu_custom_call.1} parent=27 // pred_check
          %p198 = pneg %p61
        $region30: #{tpu_custom_call.1} parent=27 // pred_check_branch
          %200 = sbr.rel (%p198) target = $region32
        $region31: #{tpu_custom_call.1} parent=27 // pred_region
          %201 = dma.done %s194, 256
        $region32: #{tpu_custom_call.1} parent=27 // pred_fallthru
          _
        %s202 = sand.u32 %s80, 1
        %s203 = scalar_lea.sflag [#allocation6], %s202
        %s204 = sand.u32 %s80, 1
        %s205 = smul.addr %s204, 16
        %s206 = scalar_lea.vmem [#allocation5], %s205
        // Predicated region
        $region33: #{tpu_custom_call.1} parent=27 // pred_check
          %p207 = pneg %p93
        $region34: #{tpu_custom_call.1} parent=27 // pred_check_branch
          %209 = sbr.rel (%p207) target = $region36
        $region35: #{tpu_custom_call.1} parent=27 // pred_region
          %210 = dma.done %s203, 256
        $region36: #{tpu_custom_call.1} parent=27 // pred_fallthru
          _
        %s211 = sand.u32 %s48, 1
        %s212 = scalar_lea.sflag [#allocation3], %s211
        %s213 = sand.u32 %s48, 1
        %s214 = smul.addr %s213, 16
        %s215 = scalar_lea.vmem [#allocation2], %s214
        %p216 = pneg %p61
        %p217 = pneg %p58
        %s218 = sand.u32 %s80, 1
        %s219 = scalar_lea.sflag [#allocation6], %s218
        %s220 = sand.u32 %s80, 1
        %s221 = smul.addr %s220, 16
        %s222 = scalar_lea.vmem [#allocation5], %s221
        %p223 = pneg %p93
        %p224 = pneg %p90
        %p225 = pneg %p119
        %p226 = pneg %p116
        %s227 = sand.u32 %s106, 1
        %s228 = scalar_lea.sflag [#allocation4], %s227
        %s229 = sand.u32 %s106, 1
        %s230 = smul.addr %s229, 8
        %s231 = scalar_lea.vmem [#allocation7], %s230
        %s232 = sadd.s32 %s26, %s27
        %p233 = scmp.lt.s32.totalorder %s232, 0
        %s234 = scalar_select %p233, %s232, 0
        %s235 = smul.u32 2, %s234
        %s236 = sadd.s32 %s26, %s27
        %p237 = scmp.lt.s32.totalorder %s236, 0
        %s238 = scalar_select %p237, %s236, 0
        %s239 = smul.u32 2, %s238
        %p240 = scmp.eq.s32.totalorder %s27, 0
        // Predicated region
        $region37: #{tpu_custom_call.1} parent=27 // pred_check
          %p241 = pneg %p240
        $region38: #{tpu_custom_call.1} parent=27 // pred_check_branch
          %243 = sbr.rel (%p241) target = $region40
        $region39: #{tpu_custom_call.1} parent=27 // pred_region
          %244 = vst [vmem:[%s231] sm:$0xff] 0.0
        $region40: #{tpu_custom_call.1} parent=27 // pred_fallthru
          _
        %s245 = sadd.s32 %s26, %s27
        %p246 = scmp.lt.s32.totalorder %s245, 1
        // Predicated region
        $region41: #{tpu_custom_call.1} parent=27 // pred_check
          %p247 = pneg %p246
        $region42: #{tpu_custom_call.1} parent=27 // pred_check_branch
          %249 = sbr.rel (%p247) target = $region44
        $region43: #{tpu_custom_call.1} parent=27 // pred_region
          %v250 = vld [vmem:[%s197] sm:$0xff]
          %v251 = vld [vmem:[%s197 + $0x8] sm:$0xff]
          %v252 = vld [vmem:[%s206] sm:$0xff]
          %v253 = vld [vmem:[%s206 + $0x8] sm:$0xff]
          %v254 = vsub.f32 %v250, %v252
          %v255 = vsub.f32 %v251, %v253
          %v256 = vand.u32 2147483647, %v254
          %v257 = vand.u32 2147483647, %v255
          %v258 = vld [vmem:[%s231] sm:$0xff]
          %v259 = vadd.f32 %v256, %v257
          %v260 = vadd.f32 %v258, %v259
          %261 = vst [vmem:[%s231] sm:$0xff] %v260
        $region44: #{tpu_custom_call.1} parent=27 // pred_fallthru
          _
        %s262 = sand.u32 %s106, 1
        %s263 = scalar_lea.sflag [#allocation4], %s262
        %s264 = sand.u32 %s106, 1
        %s265 = smul.addr %s264, 8
        %s266 = scalar_lea.vmem [#allocation7], %s265
        // Predicated region
        $region45: #{tpu_custom_call.1} parent=27 // pred_check
          %p267 = pneg %p116
        $region46: #{tpu_custom_call.1} parent=27 // pred_check_branch
          %269 = sbr.rel (%p267) target = $region48
        $region47: #{tpu_custom_call.1} parent=27 // pred_region
          %s271 = ssub.s32 128, 128
          %272 = vsyncadd %s263, %s271
          %s273 = smul.addr %s26, 128
          %s274 = scalar_lea.hbm %s2, %s273
          %s276 = sshll.u32 %s266, 4
          %s277 = int_to_ptr.vmem [resolvable:$true] %s276
          %279 = dma.vmem_to_hbm [thread:$0]  %s277, 128, %s274, %s263
        $region48: #{tpu_custom_call.1} parent=27 // pred_fallthru
          _
      $region28: #{tpu_custom_call.1} parent=5 // pred_fallthru
        _
      %p280 = scmp.le.s32.totalorder 2, %s17
      // Predicated region
      $region49: #{tpu_custom_call.1} parent=5 // pred_check
        %p281 = pneg %p280
      $region50: #{tpu_custom_call.1} parent=5 // pred_check_branch
        %283 = sbr.rel (%p281) target = $region52
      $region51: #{tpu_custom_call.1} parent=5 // pred_region
        %s284 = ssub.s32 %s17, 2
        // Predicated region
        $region53: #{tpu_custom_call.1} parent=51 // pred_check
          %p285 = pneg %p122
        $region54: #{tpu_custom_call.1} parent=51 // pred_check_branch
          %287 = sbr.rel (%p285) target = $region56
        $region55: #{tpu_custom_call.1} parent=51 // pred_region
          %s288 = sand.u32 %s107, 1
          %s289 = scalar_lea.sflag [#allocation4], %s288
          %s290 = sand.u32 %s107, 1
          %s291 = smul.addr %s290, 8
          %s292 = scalar_lea.vmem [#allocation7], %s291
          %293 = dma.done %s289, 128
        $region56: #{tpu_custom_call.1} parent=51 // pred_fallthru
          _
      $region52: #{tpu_custom_call.1} parent=5 // pred_fallthru
        _
    $region6: #{tpu_custom_call.1} parent=1 // loop_footer
      %s21 = sadd.s32 1, %s17
    $region7: #{tpu_custom_call.1} parent=1 // loop_footer_branch
      %16 = sbr.rel target = $region3
    $region8: #{tpu_custom_call.1} parent=1 // loop_exit
      _
    %294 = vsyncpa [#allocation3], 1
    %s295 = scalar_lea.sflag [#allocation3], 1
    %296 = vsyncpa %s295, 1
    %297 = vsyncpa [#allocation6], 1
    %s298 = scalar_lea.sflag [#allocation6], 1
    %299 = vsyncpa %s298, 1
    %300 = vsyncpa [#allocation4], 1
    %s301 = scalar_lea.sflag [#allocation4], 1
    %302 = vsyncpa %s301, 1

</llo_original>
